<compile_context>
chip_gen: v7x
topology: tpu7x:2x2x1
jax: 0.10.0
libtpu: 0.0.40
codegen_flags: <defaults>
</compile_context>

<pallas_src>
import jax
import jax.numpy as jnp
from jax.experimental import pallas as pl
from jax.experimental.pallas import tpu as pltpu

_LANE = 128          # vreg lane width (last block dim)
_SUBLANE = 8         # sublane multiple for second-to-last block dim
_MAX_TILE_ROWS = 2048  # rows of 128 lanes per grid step (262,144 samples/step)


def _round_up(x, m):
    return ((x + m - 1) // m) * m


def _logreg_kernel(w_ref, b_ref, x_ref, o_ref):
    # w_ref: SMEM (1, 2)    b_ref: SMEM (1, 1)
    # x_ref: VMEM (2, TILE_R, 128)  feature-major, sublane+lane dense
    # o_ref: VMEM (TILE_R, 128)     sublane+lane dense
    w0 = w_ref[0, 0]
    w1 = w_ref[0, 1]
    b = b_ref[0, 0]

    x0 = x_ref[0].astype(jnp.float32)   # (TILE_R, 128) feature 0
    x1 = x_ref[1].astype(jnp.float32)   # (TILE_R, 128) feature 1

    # Linear(2, 1): two scalar-broadcast FMAs on the VPU (no MXU needed).
    z = w0 * x0 + w1 * x1 + b
    # sigmoid(z) == 0.5 * (tanh(z / 2) + 1): one EUP transcendental + 2 VPU ops,
    # tighter than 1/(1+exp(-z)) with a full-precision divide; saturates
    # correctly to 0 / 1 for large |z|.
    o_ref[...] = (0.5 * (jnp.tanh(0.5 * z) + 1.0)).astype(o_ref.dtype)


def logistic_regression_forward(x, weight, bias, max_tile_rows=_MAX_TILE_ROWS):
    """x: (N, 2); weight: (1, 2); bias: (1,) -> (N, 1) == sigmoid(x @ w.T + b)."""
    n = x.shape[0]
    out_dtype = x.dtype

    # --- tile sizing: everything a multiple of (8, 128) so lowering is clean ---
    max_tile_rows = max(_SUBLANE, (int(max_tile_rows) // _SUBLANE) * _SUBLANE)
    n_rows = pl.cdiv(n, _LANE)                         # 128-sample rows needed
    tile_r = min(max_tile_rows, _round_up(n_rows, _SUBLANE))
    n_rows_pad = _round_up(n_rows, tile_r)
    n_pad = n_rows_pad * _LANE

    # --- wrapper-side relayout (feature-major, (R, 128)-shaped) ---
    # Layout plumbing only; a feature-major producer would make these free.
    xt = jnp.transpose(x)                              # (2, N)
    if n_pad != n:
        xt = jnp.pad(xt, ((0, 0), (0, n_pad - n)))
    x3 = xt.reshape(2, n_rows_pad, _LANE)              # (2, R, 128)

    w_smem = weight.reshape(1, 2).astype(jnp.float32)
    b_smem = bias.reshape(1, 1).astype(jnp.float32)

    out3 = pl.pallas_call(
        _logreg_kernel,
        out_shape=jax.ShapeDtypeStruct((n_rows_pad, _LANE), out_dtype),
        grid=(n_rows_pad // tile_r,),
        in_specs=[
            pl.BlockSpec(memory_space=pltpu.MemorySpace.SMEM),     # weight scalars
            pl.BlockSpec(memory_space=pltpu.MemorySpace.SMEM),     # bias scalar
            pl.BlockSpec((2, tile_r, _LANE), lambda i: (0, i, 0)),  # x^T tile
        ],
        out_specs=pl.BlockSpec((tile_r, _LANE), lambda i: (i, 0)),  # dense out
        compiler_params=pltpu.CompilerParams(
            dimension_semantics=("parallel",),   # shard batch tiles across TCs
        ),
    )(w_smem, b_smem, x3)

    # Back to the PyTorch (N, 1) layout (padded tail lanes are discarded).
    return out3.reshape(n_pad)[:n].reshape(n, 1)


if __name__ == "__main__":
    key = jax.random.PRNGKey(0)
    kx, kw, kb, kx2 = jax.random.split(key, 4)

    in_features = 2
    out_features = 1

    # Deterministic parameter init, mimicking PyTorch nn.Linear default
    # (uniform in [-1/sqrt(fan_in), 1/sqrt(fan_in)]).
    bound = 1.0 / jnp.sqrt(jnp.float32(in_features))
    weight = jax.random.uniform(kw, (out_features, in_features),
                                dtype=jnp.float32, minval=-bound, maxval=bound)
    bias = jax.random.uniform(kb, (out_features,),
                              dtype=jnp.float32, minval=-bound, maxval=bound)

    def ref_fn(xv):
        return 1.0 / (1.0 + jnp.exp(-(xv @ weight.T + bias)))

    # Small batch consistent with the module's (N, 2) -> (N, 1) forward.
    batch = 8
    x = jax.random.normal(kx, (batch, in_features), dtype=jnp.float32)
    out = logistic_regression_forward(x, weight, bias)
    jax.block_until_ready(out)
    assert out.shape == (batch, 1)
    assert jnp.allclose(out, ref_fn(x), atol=1e-6, rtol=1e-6)

    # A second, non-multiple-of-128 batch to exercise padding + tail slicing.
    batch2 = 777
    x2 = jax.random.normal(kx2, (batch2, in_features), dtype=jnp.float32)
    out2 = logistic_regression_forward(x2, weight, bias)
    jax.block_until_ready(out2)
    assert out2.shape == (batch2, 1)
    assert jnp.allclose(out2, ref_fn(x2), atol=1e-6, rtol=1e-6)

    print("KERNEL_OK")
</pallas_src>

<mosaic_0001>
module attributes {stable_mosaic.version = 11 : i64} {
  func.func @_logreg_kernel(%arg0: i32, %arg1: memref<1x2xf32, #tpu.memory_space<smem>>, %arg2: memref<1x1xf32, #tpu.memory_space<smem>>, %arg3: memref<2x8x128xf32, #tpu.memory_space<vmem>>, %arg4: memref<8x128xf32, #tpu.memory_space<vmem>>) attributes {dimension_semantics = [#tpu.dimension_semantics<parallel>], iteration_bounds = array<i64: 1>, scalar_prefetch = 0 : i64, scratch_operands = 0 : i64, tpu.core_type = #tpu.core_type<tc>, window_params = [{transform_indices = @transform_0, window_bounds = array<i64: 1, 2>}, {transform_indices = @transform_1, window_bounds = array<i64: 1, 1>}, {transform_indices = @transform_2, window_bounds = array<i64: 2, 8, 128>}, {transform_indices = @transform_3, window_bounds = array<i64: 8, 128>}]} {
    %c0 = arith.constant 0 : index
    %c0_0 = arith.constant 0 : index
    %0 = memref.load %arg1[%c0, %c0_0] : memref<1x2xf32, #tpu.memory_space<smem>>
    %c0_1 = arith.constant 0 : index
    %c1 = arith.constant 1 : index
    %1 = memref.load %arg1[%c0_1, %c1] : memref<1x2xf32, #tpu.memory_space<smem>>
    %c0_2 = arith.constant 0 : index
    %c0_3 = arith.constant 0 : index
    %2 = memref.load %arg2[%c0_2, %c0_3] : memref<1x1xf32, #tpu.memory_space<smem>>
    %c0_4 = arith.constant 0 : index
    %c0_5 = arith.constant 0 : index
    %c0_6 = arith.constant 0 : index
    %3 = vector.load %arg3[%c0_4, %c0_5, %c0_6] : memref<2x8x128xf32, #tpu.memory_space<vmem>>, vector<1x8x128xf32>
    %4 = vector.shape_cast %3 : vector<1x8x128xf32> to vector<8x128xf32>
    %c1_7 = arith.constant 1 : index
    %c0_8 = arith.constant 0 : index
    %c0_9 = arith.constant 0 : index
    %5 = vector.load %arg3[%c1_7, %c0_8, %c0_9] : memref<2x8x128xf32, #tpu.memory_space<vmem>>, vector<1x8x128xf32>
    %6 = vector.shape_cast %5 : vector<1x8x128xf32> to vector<8x128xf32>
    %7 = vector.broadcast %0 : f32 to vector<8x128xf32>
    %8 = arith.mulf %7, %4 : vector<8x128xf32>
    %9 = vector.broadcast %1 : f32 to vector<8x128xf32>
    %10 = arith.mulf %9, %6 : vector<8x128xf32>
    %11 = arith.addf %8, %10 : vector<8x128xf32>
    %12 = vector.broadcast %2 : f32 to vector<8x128xf32>
    %13 = arith.addf %11, %12 : vector<8x128xf32>
    %cst = arith.constant 5.000000e-01 : f32
    %14 = vector.broadcast %cst : f32 to vector<8x128xf32>
    %15 = arith.mulf %14, %13 : vector<8x128xf32>
    %16 = math.tanh %15 : vector<8x128xf32>
    %cst_10 = arith.constant 1.000000e+00 : f32
    %17 = vector.broadcast %cst_10 : f32 to vector<8x128xf32>
    %18 = arith.addf %16, %17 : vector<8x128xf32>
    %cst_11 = arith.constant 5.000000e-01 : f32
    %19 = vector.broadcast %cst_11 : f32 to vector<8x128xf32>
    %20 = arith.mulf %19, %18 : vector<8x128xf32>
    %c0_12 = arith.constant 0 : index
    %c0_13 = arith.constant 0 : index
    %21 = vector.load %arg4[%c0_12, %c0_13] : memref<8x128xf32, #tpu.memory_space<vmem>>, vector<8x128xf32>
    tpu.vector_store %arg4[%c0_12, %c0_13], %20 {strides = array<i32>} : memref<8x128xf32, #tpu.memory_space<vmem>>, vector<8x128xf32>,
    return
  }
  func.func @transform_0(%arg0: i32) -> (i32, i32) {
    %c0_i32 = arith.constant 0 : i32
    %c0_i32_0 = arith.constant 0 : i32
    %c0_i32_1 = arith.constant 0 : i32
    return %c0_i32, %c0_i32_0 : i32, i32
  }
  func.func @transform_1(%arg0: i32) -> (i32, i32) {
    %c0_i32 = arith.constant 0 : i32
    %c0_i32_0 = arith.constant 0 : i32
    %c0_i32_1 = arith.constant 0 : i32
    return %c0_i32, %c0_i32_0 : i32, i32
  }
  func.func @transform_2(%arg0: i32) -> (i32, i32, i32) {
    %c0_i32 = arith.constant 0 : i32
    %c0_i32_0 = arith.constant 0 : i32
    %c0_i32_1 = arith.constant 0 : i32
    return %c0_i32, %arg0, %c0_i32_0 : i32, i32, i32
  }
  func.func @transform_3(%arg0: i32) -> (i32, i32) {
    %c0_i32 = arith.constant 0 : i32
    %c0_i32_0 = arith.constant 0 : i32
    return %arg0, %c0_i32 : i32, i32
  }
}

</mosaic_0001>

<llo_original>
// kernel: tpu_custom_call.1
$region0: #{tpu_custom_call.1}
  #allocation0 [shape = 'u32[]', space=smem, size = 0x4, offset = 0x4, fixed_abs, tag = 'smem constant byte address 0x4 - core index']
  #allocation1 [shape = 'u32[144,128]{1,0:T(1,128)}', space=vmem, size = 0x12000, scoped, tag = 'internal scratch']
  #allocation2 [shape = 'f32[1,1]{1,0:T(1,128)S(6)}', space=smem, size = 0x200, scoped, tag = 'scoped memory for tpu_custom_call.1']
  %s0 = inlined_call_operand.vmem [shape: f32[1,2], index: 0, kind: input, shape index: {}]
  %s1 = inlined_call_operand.<no memory space> [shape: f32[1,1], index: 1, kind: input, shape index: {}]
  %s2 = inlined_call_operand.hbm [shape: f32[2,8,128], index: 2, kind: input, shape index: {}]
  %s3 = inlined_call_operand.hbm [shape: f32[8,128], index: 3, kind: output, shape index: {}]
  %s4 = sld [smem:[#allocation0]]
  $region30: #{tpu_custom_call.1} parent=0
    _
  %s6 = ssub.s32 1, %s4
  %s7 = scalar_select 0, %s6, %s4
  %8 = sst [smem:[#allocation2]] %s1
  $region1: #{tpu_custom_call.1} parent=0
    #allocation3 [shape = 'u8[512]{0}', space=smem, size = 0x200, scoped, tag = 'input window, operand 0, single buffered']
    #allocation4 [shape = 's32[1]{0}', space=sflag, size = 0x4, scoped, tag = 'scoped memory for tpu_custom_call.1']
    #allocation5 [shape = 's32[1]{0}', space=sflag, size = 0x4, scoped, tag = 'scoped memory for tpu_custom_call.1']
    #allocation6 [shape = 's32[1]{0}', space=sflag, size = 0x4, scoped, tag = 'scoped memory for tpu_custom_call.1']
    #allocation7 [shape = 'u8[8192]{0}', space=vmem, size = 0x2000, scoped, tag = 'input window, operand 2, single buffered']
    #allocation8 [shape = 'u8[4096]{0}', space=vmem, size = 0x1000, scoped, tag = 'output window, operand 0, single buffered']
    %9 = vsyncpa [#allocation6], 0
    %10 = vsyncpa [#allocation4], 0
    %11 = vsyncpa [#allocation5], 0
    // Predicated region
    $region2: #{tpu_custom_call.1} parent=1 // pred_check
      _
    $region3: #{tpu_custom_call.1} parent=1 // pred_check_branch
      %13 = sbr.rel (0) target = $region5
    $region4: #{tpu_custom_call.1} parent=1 // pred_region
      %s15 = ssub.s32 16, 16
      %16 = vsyncadd [#allocation6], %s15
      %s18 = sshll.u32 %s0, 4
      %s19 = int_to_ptr.vmem [resolvable:$true] %s18
      %21 = dma.vmem_to_smem %s19, 16, [#allocation3], [#allocation6]
    $region5: #{tpu_custom_call.1} parent=1 // pred_fallthru
      _
    // Predicated region
    $region6: #{tpu_custom_call.1} parent=1 // pred_check
      _
    $region7: #{tpu_custom_call.1} parent=1 // pred_check_branch
      %23 = sbr.rel (0) target = $region9
    $region8: #{tpu_custom_call.1} parent=1 // pred_region
      _
    $region9: #{tpu_custom_call.1} parent=1 // pred_fallthru
      _
    // Predicated region
    $region10: #{tpu_custom_call.1} parent=1 // pred_check
      _
    $region11: #{tpu_custom_call.1} parent=1 // pred_check_branch
      %25 = sbr.rel (0) target = $region13
    $region12: #{tpu_custom_call.1} parent=1 // pred_region
      %s27 = ssub.s32 256, 256
      %28 = vsyncadd [#allocation4], %s27
      %s29 = sshll.u32 [#allocation7], 4
      %s30 = int_to_ptr.vmem [resolvable:$true] %s29
      %35 = dma.hbm_to_vmem [thread:$0]  %s2, 256, %s30, [#allocation4], 128, 128, 8
    $region13: #{tpu_custom_call.1} parent=1 // pred_fallthru
      _
    // Predicated region
    $region14: #{tpu_custom_call.1} parent=1 // pred_check
      _
    $region15: #{tpu_custom_call.1} parent=1 // pred_check_branch
      %37 = sbr.rel (0) target = $region17
    $region16: #{tpu_custom_call.1} parent=1 // pred_region
      %38 = dma.done [#allocation6], 16
    $region17: #{tpu_custom_call.1} parent=1 // pred_fallthru
      _
    // Predicated region
    $region18: #{tpu_custom_call.1} parent=1 // pred_check
      _
    $region19: #{tpu_custom_call.1} parent=1 // pred_check_branch
      %40 = sbr.rel (0) target = $region21
    $region20: #{tpu_custom_call.1} parent=1 // pred_region
      %41 = dma.done [#allocation4], 256
    $region21: #{tpu_custom_call.1} parent=1 // pred_fallthru
      _
    %42 = sfence
    %s43 = sld [smem:[#allocation3]]
    %s44 = sld [smem:[#allocation3 + $0x1]]
    %s45 = sld [smem:[#allocation2]]
    %v46 = vld [vmem:[#allocation7] sm:$0xff]
    %s47 = scalar_lea.vmem [#allocation7], 8
    %v48 = vld [vmem:[%s47] sm:$0xff]
    %v49 = vstv %s43
    %v50 = vmul.f32 %v49, %v46
    %v51 = vstv %s44
    %v52 = vmul.f32 %v51, %v48
    %v53 = vadd.f32 %v50, %v52
    %v54 = vstv %s45
    %v55 = vadd.f32 %v53, %v54
    %v56 = vmul.f32 %v55, 0.5
    %v57 = vtanh.pop %v56
    %v58 = vadd.f32 %v57, 1.0
    %v59 = vmul.f32 %v58, 0.5
    %60 = vst [vmem:[#allocation8] sm:$0xff] %v59
    // Predicated region
    $region22: #{tpu_custom_call.1} parent=1 // pred_check
      _
    $region23: #{tpu_custom_call.1} parent=1 // pred_check_branch
      %62 = sbr.rel (0) target = $region25
    $region24: #{tpu_custom_call.1} parent=1 // pred_region
      %s64 = ssub.s32 128, 128
      %65 = vsyncadd [#allocation5], %s64
      %s67 = sshll.u32 [#allocation8], 4
      %s68 = int_to_ptr.vmem [resolvable:$true] %s67
      %70 = dma.vmem_to_hbm [thread:$0]  %s68, 128, %s3, [#allocation5]
    $region25: #{tpu_custom_call.1} parent=1 // pred_fallthru
      _
    // Predicated region
    $region26: #{tpu_custom_call.1} parent=1 // pred_check
      _
    $region27: #{tpu_custom_call.1} parent=1 // pred_check_branch
      %72 = sbr.rel (0) target = $region29
    $region28: #{tpu_custom_call.1} parent=1 // pred_region
      %73 = dma.done [#allocation5], 128
    $region29: #{tpu_custom_call.1} parent=1 // pred_fallthru
      _
    %74 = vsyncpa [#allocation4], 1
    %75 = vsyncpa [#allocation5], 1
    %76 = vsyncpa [#allocation6], 1

</llo_original>
